<compile_context>
chip_gen: v5e
topology: v5e:2x2
jax: 0.10.0
libtpu: 0.0.40
codegen_flags: <defaults>
</compile_context>

<pallas_src>
import functools
import math

import jax
import jax.numpy as jnp
from jax.experimental import pallas as pl
from jax.experimental.pallas import tpu as pltpu


def _coord_embed_kernel(x_ref, pe_ref, o_ref, *, scale):
    # x_ref / o_ref : (Bt, Lt) tile of the flattened (B, S*D) array.
    # pe_ref        : (1, Lt) precomputed positional-embedding row, broadcast
    #                 over the Bt batch rows of the tile.  Pure streamed mul-add.
    o_ref[...] = (x_ref[...].astype(jnp.float32) * scale + pe_ref[...]).astype(o_ref.dtype)


def _choose_tiles(batch, ncols, itemsize, target_tile_bytes=3 * 1024 * 1024):
    """Pick a lane-dense (Bt, Lt) tile of ~target_tile_bytes.

    Lt is a multiple of the 512-byte lane quantum (or the full width); Bt is a
    multiple of the native sublane packing for the dtype.  ~3 MiB tiles keep
    2 arrays x 2 pipeline buffers <= 12 MiB (safe under v5e's 16 MiB scoped
    default, well inside v6e's 32 MiB and v7x's 64 MiB physical VMEM) while
    amortizing the ~0.35 us per-grid-step overhead.
    """
    lane_q = max(128, 512 // itemsize)   # 128 f32, 256 bf16, 512 int8/fp8
    subl_q = max(8, 32 // itemsize)      # 8 f32,  16 bf16,  32 int8/fp8

    # Column block: largest lane-dense power-of-two-growing divisor of ncols
    # that still fits the tile budget, or the full width as a fallback.
    if ncols % lane_q == 0:
        lt = lane_q
        while ncols % (lt * 2) == 0 and (lt * 2) * itemsize <= target_tile_bytes:
            lt *= 2
    else:
        lt = ncols  # full-extent fallback; correct, possibly masked stores

    # Batch rows to fill the remaining tile budget (dtype-aware sublane quantum).
    rows = max(1, target_tile_bytes // (lt * itemsize))
    if rows >= batch:
        bt = batch
    else:
        bt = min(batch, max(subl_q, (rows // subl_q) * subl_q))

    # v7x megacore: guarantee >= 2 parallel blocks when there is enough data to
    # make splitting the HBM stream across both TensorCores worthwhile.
    n_blocks = -(-batch // bt) * -(-ncols // lt)
    total_bytes = batch * ncols * itemsize
    if n_blocks < 2 and total_bytes >= (1 << 20):
        if ncols % (2 * lane_q) == 0:
            lt = ncols // 2                 # still lane-dense
        elif batch >= 2:
            bt = -(-batch // 2)             # split the batch instead
    return bt, lt


def coordinate_embedding(x: jax.Array, timestep, *, maxlen: int = 90) -> jax.Array:
    """x: (B, S, D) float.  timestep: python int or traced scalar.

    Returns x * sqrt(D) + pe[:S], with pe built from position and timestep
    exactly as in the PyTorch CoordinateEmbedding.forward.
    """
    B, S, D = x.shape
    assert S <= maxlen, f"sequence length {S} exceeds MAXLEN={maxlen}"
    N = S * D

    # ---- tiny O(S*D) column-only precompute (plain jnp, negligible) --------
    d_idx = jnp.arange(D, dtype=jnp.int32)
    exponent = (2 * (d_idx // 2)).astype(jnp.float32)                  # 2*floor(d/2)
    w = jnp.exp((-math.log(10000.0) / float(D)) * exponent)            # 10000^(-2j/D)
    even = (d_idx % 2) == 0
    t = jnp.asarray(timestep, dtype=jnp.float32)                       # traced-scalar safe
    pos_ang = jnp.arange(S, dtype=jnp.float32)[:, None] * w[None, :]   # (S, D)
    t_ang = t * w                                                      # (D,)
    pe = (jnp.where(even[None, :], jnp.sin(pos_ang), jnp.cos(pos_ang))
          + jnp.where(even, jnp.sin(t_ang), jnp.cos(t_ang))[None, :])  # (S, D) f32
    pe_row = pe.reshape(1, N)                                          # (1, S*D)

    # ---- lane-dense flattened view + tiling ---------------------------------
    x2 = x.reshape(B, N)
    bt, lt = _choose_tiles(B, N, x2.dtype.itemsize)
    # Column axis OUTER: the (1, Lt) pe-row block index is constant across the
    # inner (batch) steps, so it is not re-fetched per step.
    grid = (pl.cdiv(N, lt), pl.cdiv(B, bt))

    out2 = pl.pallas_call(
        functools.partial(_coord_embed_kernel, scale=math.sqrt(float(D))),
        out_shape=jax.ShapeDtypeStruct((B, N), x.dtype),
        grid=grid,
        in_specs=[
            pl.BlockSpec((bt, lt), lambda j, i: (i, j)),   # x tile
            pl.BlockSpec((1, lt), lambda j, i: (0, j)),    # precomputed pe row
        ],
        out_specs=pl.BlockSpec((bt, lt), lambda j, i: (i, j)),
        compiler_params=pltpu.CompilerParams(
            dimension_semantics=("parallel", "parallel"),
        ),
    )(x2, pe_row)
    return out2.reshape(B, S, D)


def _coordinate_embedding_ref(x, timestep, maxlen=90):
    """Pure-JAX reference mirroring the PyTorch forward (even D)."""
    B, S, D = x.shape
    position = jnp.arange(maxlen, dtype=jnp.float32)[:, None]
    inv_freq = jnp.exp(-math.log(10000.0) * jnp.arange(0, D, 2, dtype=jnp.float32) / D)
    pe = jnp.zeros((maxlen, D), dtype=jnp.float32)
    pe = pe.at[:, 0::2].set(jnp.sin(position * inv_freq) + jnp.sin(timestep * inv_freq))
    pe = pe.at[:, 1::2].set(jnp.cos(position * inv_freq) + jnp.cos(timestep * inv_freq))
    return x * math.sqrt(D) + pe[None, :S, :]


if __name__ == "__main__":
    # Small shape consistent with the module: (batch=2, seq=8, dmodel=32).
    B, S, D = 2, 8, 32
    timestep = 5
    x = jax.random.normal(jax.random.PRNGKey(0), (B, S, D), dtype=jnp.float32)

    out = jax.block_until_ready(coordinate_embedding(x, timestep))
    ref = _coordinate_embedding_ref(x, timestep)
    assert out.shape == (B, S, D)
    assert jnp.allclose(out, ref, atol=1e-4, rtol=1e-4), "mismatch vs reference (small)"

    # Larger shape exercising the tiled / multi-block (>=2 parallel blocks) path.
    B2, S2, D2 = 16, 64, 256
    x_big = jax.random.normal(jax.random.PRNGKey(1), (B2, S2, D2), dtype=jnp.float32)
    out_big = jax.block_until_ready(coordinate_embedding(x_big, 7))
    ref_big = _coordinate_embedding_ref(x_big, 7)
    assert jnp.allclose(out_big, ref_big, atol=1e-4, rtol=1e-4), "mismatch vs reference (large)"

    # Traced-timestep path (jit over timestep must not retrace the pallas_call).
    jitted = jax.jit(coordinate_embedding)
    out_j = jax.block_until_ready(jitted(x_big, jnp.int32(9)))
    assert jnp.allclose(out_j, _coordinate_embedding_ref(x_big, 9), atol=1e-4, rtol=1e-4)

    print("KERNEL_OK")
</pallas_src>

<mosaic_0001>
module attributes {stable_mosaic.version = 11 : i64} {
  func.func @_coord_embed_kernel(%arg0: i32, %arg1: i32, %arg2: memref<2x256xf32, #tpu.memory_space<vmem>>, %arg3: memref<1x256xf32, #tpu.memory_space<vmem>>, %arg4: memref<2x256xf32, #tpu.memory_space<vmem>>) attributes {dimension_semantics = [#tpu.dimension_semantics<parallel>, #tpu.dimension_semantics<parallel>], iteration_bounds = array<i64: 1, 1>, scalar_prefetch = 0 : i64, scratch_operands = 0 : i64, tpu.core_type = #tpu.core_type<tc>, window_params = [{transform_indices = @transform_0, window_bounds = array<i64: 2, 256>}, {transform_indices = @transform_1, window_bounds = array<i64: 1, 256>}, {transform_indices = @transform_2, window_bounds = array<i64: 2, 256>}]} {
    %c0 = arith.constant 0 : index
    %c0_0 = arith.constant 0 : index
    %0 = vector.load %arg2[%c0, %c0_0] : memref<2x256xf32, #tpu.memory_space<vmem>>, vector<2x256xf32>
    %cst = arith.constant 5.65685415 : f32
    %1 = vector.broadcast %cst : f32 to vector<2x256xf32>
    %2 = arith.mulf %0, %1 : vector<2x256xf32>
    %c0_1 = arith.constant 0 : index
    %c0_2 = arith.constant 0 : index
    %3 = vector.load %arg3[%c0_1, %c0_2] : memref<1x256xf32, #tpu.memory_space<vmem>>, vector<1x256xf32>
    %4 = vector.broadcast %3 : vector<1x256xf32> to vector<2x256xf32>
    %5 = arith.addf %2, %4 : vector<2x256xf32>
    %c0_3 = arith.constant 0 : index
    %c0_4 = arith.constant 0 : index
    %6 = vector.load %arg4[%c0_3, %c0_4] : memref<2x256xf32, #tpu.memory_space<vmem>>, vector<2x256xf32>
    tpu.vector_store %arg4[%c0_3, %c0_4], %5 {strides = array<i32>} : memref<2x256xf32, #tpu.memory_space<vmem>>, vector<2x256xf32>,
    return
  }
  func.func @transform_0(%arg0: i32, %arg1: i32) -> (i32, i32) {
    %c0_i32 = arith.constant 0 : i32
    return %arg1, %arg0 : i32, i32
  }
  func.func @transform_1(%arg0: i32, %arg1: i32) -> (i32, i32) {
    %c0_i32 = arith.constant 0 : i32
    %c0_i32_0 = arith.constant 0 : i32
    return %c0_i32, %arg0 : i32, i32
  }
  func.func @transform_2(%arg0: i32, %arg1: i32) -> (i32, i32) {
    %c0_i32 = arith.constant 0 : i32
    return %arg1, %arg0 : i32, i32
  }
}

</mosaic_0001>

<llo_original>
// kernel: tpu_custom_call.1
$region0: #{tpu_custom_call.1}
  #allocation0 [shape = 'u32[]', space=smem, size = 0x4, offset = 0x4, fixed_abs, tag = 'smem constant byte address 0x4 - core index']
  #allocation1 [shape = 'u32[72,128]{1,0:T(1,128)}', space=vmem, size = 0x9000, scoped, tag = 'internal scratch']
  %s0 = inlined_call_operand.hbm [shape: f32[2,256], index: 0, kind: input, shape index: {}]
  %s1 = inlined_call_operand.hbm [shape: f32[1,256], index: 1, kind: input, shape index: {}]
  %s2 = inlined_call_operand.hbm [shape: f32[2,256], index: 2, kind: output, shape index: {}]
  %s3 = sld [smem:[#allocation0]]
  $region26: #{tpu_custom_call.1} parent=0
    _
  %s5 = ssub.s32 1, %s3
  %s6 = scalar_select 0, %s5, %s3
  $region1: #{tpu_custom_call.1} parent=0
    #allocation2 [shape = 'u8[2048]{0}', space=vmem, size = 0x800, scoped, tag = 'input window, operand 0, single buffered']
    #allocation3 [shape = 's32[1]{0}', space=sflag, size = 0x4, scoped, tag = 'scoped memory for tpu_custom_call.1']
    #allocation4 [shape = 's32[1]{0}', space=sflag, size = 0x4, scoped, tag = 'scoped memory for tpu_custom_call.1']
    #allocation5 [shape = 'u8[1024]{0}', space=vmem, size = 0x400, scoped, tag = 'input window, operand 1, single buffered']
    #allocation6 [shape = 's32[1]{0}', space=sflag, size = 0x4, scoped, tag = 'scoped memory for tpu_custom_call.1']
    #allocation7 [shape = 'u8[2048]{0}', space=vmem, size = 0x800, scoped, tag = 'output window, operand 0, single buffered']
    %7 = vsyncpa [#allocation3], 0
    %8 = vsyncpa [#allocation6], 0
    %9 = vsyncpa [#allocation4], 0
    // Predicated region
    $region2: #{tpu_custom_call.1} parent=1 // pred_check
      _
    $region3: #{tpu_custom_call.1} parent=1 // pred_check_branch
      %11 = sbr.rel (0) target = $region5
    $region4: #{tpu_custom_call.1} parent=1 // pred_region
      %13 = vsyncadd [#allocation3], 0
      %s15 = sshll.u32 %s0, 4
      %s16 = int_to_ptr.hbm [resolvable:$true] %s15
      %s17 = sshll.u32 [#allocation2], 4
      %s18 = int_to_ptr.vmem [resolvable:$true] %s17
      %20 = dma.hbm_to_vmem [thread:$0]  %s16, 64, %s18, [#allocation3]
    $region5: #{tpu_custom_call.1} parent=1 // pred_fallthru
      _
    // Predicated region
    $region6: #{tpu_custom_call.1} parent=1 // pred_check
      _
    $region7: #{tpu_custom_call.1} parent=1 // pred_check_branch
      %22 = sbr.rel (0) target = $region9
    $region8: #{tpu_custom_call.1} parent=1 // pred_region
      %24 = vsyncadd [#allocation6], 0
      %s26 = sshll.u32 %s1, 4
      %s27 = int_to_ptr.hbm [resolvable:$true] %s26
      %s28 = sshll.u32 [#allocation5], 4
      %s29 = int_to_ptr.vmem [resolvable:$true] %s28
      %31 = dma.hbm_to_vmem [thread:$0]  %s27, 32, %s29, [#allocation6]
    $region9: #{tpu_custom_call.1} parent=1 // pred_fallthru
      _
    // Predicated region
    $region10: #{tpu_custom_call.1} parent=1 // pred_check
      _
    $region11: #{tpu_custom_call.1} parent=1 // pred_check_branch
      %33 = sbr.rel (0) target = $region13
    $region12: #{tpu_custom_call.1} parent=1 // pred_region
      %35 = dma.done [#allocation3], 64
    $region13: #{tpu_custom_call.1} parent=1 // pred_fallthru
      _
    // Predicated region
    $region14: #{tpu_custom_call.1} parent=1 // pred_check
      _
    $region15: #{tpu_custom_call.1} parent=1 // pred_check_branch
      %37 = sbr.rel (0) target = $region17
    $region16: #{tpu_custom_call.1} parent=1 // pred_region
      %39 = dma.done [#allocation6], 32
    $region17: #{tpu_custom_call.1} parent=1 // pred_fallthru
      _
    %v40 = vld [vmem:[#allocation2] sm:$0xf]
    %v41 = vmul.f32 %v40, 5.656854
    %v42 = vld [vmem:[#allocation5] sm:$0x3]
    %v44 = vperm.slane %v42, 0
    %v45 = vperm.slane %v42, 1
    %v46 = vrot.slane %v45, 6
    %vm47 = vcmask 1041408
    %v48 = vsel %vm47, %v44, %v46
    %v50 = vadd.f32 %v41, %v48
    %51 = vst [vmem:[#allocation7] sm:$0xf] %v50
    // Predicated region
    $region18: #{tpu_custom_call.1} parent=1 // pred_check
      _
    $region19: #{tpu_custom_call.1} parent=1 // pred_check_branch
      %53 = sbr.rel (0) target = $region21
    $region20: #{tpu_custom_call.1} parent=1 // pred_region
      %55 = vsyncadd [#allocation4], 0
      %s57 = sshll.u32 [#allocation7], 4
      %s58 = int_to_ptr.vmem [resolvable:$true] %s57
      %s59 = sshll.u32 %s2, 4
      %s60 = int_to_ptr.hbm [resolvable:$true] %s59
      %62 = dma.vmem_to_hbm [thread:$0]  %s58, 64, %s60, [#allocation4]
    $region21: #{tpu_custom_call.1} parent=1 // pred_fallthru
      _
    // Predicated region
    $region22: #{tpu_custom_call.1} parent=1 // pred_check
      _
    $region23: #{tpu_custom_call.1} parent=1 // pred_check_branch
      %64 = sbr.rel (0) target = $region25
    $region24: #{tpu_custom_call.1} parent=1 // pred_region
      %66 = dma.done [#allocation4], 64
    $region25: #{tpu_custom_call.1} parent=1 // pred_fallthru
      _
    %67 = vsyncpa [#allocation3], 1
    %68 = vsyncpa [#allocation6], 1
    %69 = vsyncpa [#allocation4], 1

</llo_original>
